<compile_context>
chip_gen: v7x
topology: tpu7x:2x2x1
jax: 0.10.0
libtpu: 0.0.40
codegen_flags: <defaults>
</compile_context>

<pallas_src>
import functools

import jax
import jax.numpy as jnp
from jax.experimental import pallas as pl
from jax.experimental.pallas import tpu as pltpu


# ------------------------------ fused kernel ------------------------------

def _ffn_kernel(x_ref, w1_ref, w2_ref, consts_ref, avg_ref, expand_ref,
                gate_w_ref, group_ref, o_ref, *, eps):
    x = x_ref[...]                                    # (tm, W) f32
    pad = x == 0.0                                    # elementwise padding mask

    b1 = consts_ref[0:1, :]
    b2 = consts_ref[1:2, :]
    gma = consts_ref[2:3, :]
    bta = consts_ref[3:4, :]

    # fc (block-diagonal over k*n_head hu-chunks) + mask + ReLU; the mask and
    # ReLU are folded into a single select: relu(mask(h)) == where(pad,0,max(h,0)).
    h = jnp.dot(x, w1_ref[...], preferred_element_type=jnp.float32) + b1
    h = jnp.where(pad, 0.0, jnp.maximum(h, 0.0))

    # fc2 + mask  (dropout == identity)
    h = jnp.dot(h, w2_ref[...], preferred_element_type=jnp.float32) + b2
    h = jnp.where(pad, 0.0, h)

    # residual + per-chunk LayerNorm (eps=1e-8); narrow per-chunk stats via
    # a (W, n_blk) matmul, broadcast back with the shared (n_blk, W) expand.
    y = h + x
    expand = expand_ref[...]                          # (n_blk, W) 0/1
    mean_b = jnp.dot(y, avg_ref[...], preferred_element_type=jnp.float32)       # (tm, n_blk)
    ex2_b = jnp.dot(y * y, avg_ref[...], preferred_element_type=jnp.float32)    # (tm, n_blk)
    var_b = jnp.maximum(ex2_b - mean_b * mean_b, 0.0)  # clamp: no NaN from cancellation
    inv_b = jax.lax.rsqrt(var_b + eps)
    mean = jnp.dot(mean_b, expand, preferred_element_type=jnp.float32)          # (tm, W)
    inv = jnp.dot(inv_b, expand, preferred_element_type=jnp.float32)            # (tm, W)
    out = (y - mean) * inv * gma + bta

    # gate: block-diag Linear(H, n_head, bias=False) -> per-token softmax over
    # heads -> broadcast back to lanes.  Subtracting the row-global max is a
    # constant shift within every per-token head group, so the per-group
    # softmax is mathematically unchanged.
    logits = jnp.dot(out, gate_w_ref[...], preferred_element_type=jnp.float32)  # (tm, n_blk)
    logits = logits - jnp.max(logits, axis=-1, keepdims=True)
    p = jnp.exp(logits)
    denom = jnp.dot(p, group_ref[...], preferred_element_type=jnp.float32)      # per-group sums
    r = pl.reciprocal(denom, approx=True)             # EUP seed ...
    r = r * (2.0 - denom * r)                         # ... + two Newton steps
    r = r * (2.0 - denom * r)                         #     -> ~f32 accuracy
    probs = p * r
    gate_full = jnp.dot(probs, expand, preferred_element_type=jnp.float32)      # (tm, W)

    o_ref[...] = out * gate_full


# ------------------------------- host wrapper ------------------------------

def _round_up(a, b):
    return (a + b - 1) // b * b


def _block_diag(block, n):
    """(p, q) -> (n*p, n*q) block-diagonal replication."""
    p, q = block.shape
    eye = jnp.eye(n, dtype=block.dtype)
    return jnp.einsum('ab,ij->aibj', eye, block).reshape(n * p, n * q)


def ffn_forward(x, params, n_head, *, eps=1e-8):
    """x: (B, L, H) float32; weights stored as (in_features, out_features)."""
    B, L, H = x.shape
    hu = H // n_head
    M = B * L
    f32 = jnp.float32

    # Lane packing: k tokens per packed row so the lane dim is 128 wide.
    k = 128 // H if (H < 128 and 128 % H == 0) else 1
    W = k * H
    n_blk = k * n_head

    fc_w = params['fc_w'].astype(f32)
    fc2_w = params['fc2_w'].astype(f32)
    gate_w = params['gate_w'].astype(f32)

    # ---- trace-time weight packing (block-diag over k*n_head hu-chunks) ---
    w1 = _block_diag(fc_w, n_blk)                     # (W, W)
    w2 = _block_diag(fc2_w, n_blk)                    # (W, W)
    gate_wp = _block_diag(gate_w, k)                  # (W, n_blk)

    def _row(v):
        return jnp.tile(v.astype(f32), n_blk)         # (W,)
    consts = jnp.zeros((8, W), f32)
    consts = (consts.at[0].set(_row(params['fc_b']))
                    .at[1].set(_row(params['fc2_b']))
                    .at[2].set(_row(params['norm_g']))
                    .at[3].set(_row(params['norm_b'])))

    lane_blk = jnp.arange(W) // hu                    # chunk id per lane
    expand = (lane_blk[None, :] == jnp.arange(n_blk)[:, None]).astype(f32)  # (n_blk, W)
    avg = expand.T / float(hu)                        # (W, n_blk)
    slot = jnp.arange(n_blk) // n_head                # token slot per chunk
    group = (slot[:, None] == slot[None, :]).astype(f32)                    # (n_blk, n_blk)

    # ---- pack / pad activations -------------------------------------------
    R = -(-M // k)                                    # packed rows needed
    # <=512-row tiles, multiple of 8, >=2 grid steps whenever R allows (v7x).
    tm = min(512, max(8, _round_up(-(-R // 2), 8)))
    R_pad = _round_up(R, tm)
    x2 = x.reshape(M, H).astype(f32)
    pad_tok = R_pad * k - M
    if pad_tok:
        x2 = jnp.concatenate([x2, jnp.zeros((pad_tok, H), f32)], axis=0)
    xp = x2.reshape(R_pad, W)

    grid = (R_pad // tm,)
    const2d = lambda i: (0, 0)

    out = pl.pallas_call(
        functools.partial(_ffn_kernel, eps=eps),
        out_shape=jax.ShapeDtypeStruct((R_pad, W), f32),
        grid=grid,
        in_specs=[
            pl.BlockSpec((tm, W), lambda i: (i, 0)),        # packed x
            pl.BlockSpec((W, W), const2d),                  # w1 (block-diag)
            pl.BlockSpec((W, W), const2d),                  # w2 (block-diag)
            pl.BlockSpec((8, W), const2d),                  # b1/b2/gamma/beta rows
            pl.BlockSpec((W, n_blk), const2d),              # narrow chunk-avg
            pl.BlockSpec((n_blk, W), const2d),              # chunk -> lane expand
            pl.BlockSpec((W, n_blk), const2d),              # gate weight (block-diag)
            pl.BlockSpec((n_blk, n_blk), const2d),          # softmax group-sum
        ],
        out_specs=pl.BlockSpec((tm, W), lambda i: (i, 0)),
        compiler_params=pltpu.CompilerParams(
            dimension_semantics=("parallel",),
            vmem_limit_bytes=32 * 1024 * 1024),
    )(xp, w1, w2, consts, avg, expand, gate_wp, group)

    return out.reshape(R_pad * k, H)[:M].reshape(B, L, H)


# ------------------------- pure-JAX reference (torch semantics) ------------

def ffn_reference(x, params, n_head, eps=1e-8):
    B, L, H = x.shape
    hu = H // n_head
    outs = []
    for i in range(n_head):
        c = x[..., i * hu:(i + 1) * hu]
        pad = c == 0
        h = c @ params['fc_w'] + params['fc_b']
        h = jnp.where(pad, 0.0, h)
        h = jnp.maximum(h, 0.0)
        h = h @ params['fc2_w'] + params['fc2_b']
        h = jnp.where(pad, 0.0, h)
        y = h + c
        mean = jnp.mean(y, axis=-1, keepdims=True)
        var = jnp.mean(jnp.square(y - mean), axis=-1, keepdims=True)
        yn = (y - mean) * jax.lax.rsqrt(var + eps) * params['norm_g'] + params['norm_b']
        outs.append(yn)
    out = jnp.concatenate(outs, axis=-1)                    # (B, L, H)
    gate = jax.nn.softmax(out @ params['gate_w'], axis=-1)  # (B, L, n_head)
    out = out.reshape(B, L, n_head, hu) * gate[..., None]
    return out.reshape(B, L, H)


# ---------------------------------- main -----------------------------------

if __name__ == "__main__":
    B, L, H, n_head = 2, 8, 32, 2          # hidden_units=32, n_head=2
    hu = H // n_head

    key = jax.random.PRNGKey(0)
    kx, k1, k2, k3, k4, k5, k6, k7 = jax.random.split(key, 8)
    params = dict(
        fc_w=jax.random.normal(k1, (hu, hu), jnp.float32) * 0.05,
        fc_b=jax.random.normal(k2, (hu,), jnp.float32) * 0.05,
        fc2_w=jax.random.normal(k3, (hu, hu), jnp.float32) * 0.05,
        fc2_b=jax.random.normal(k4, (hu,), jnp.float32) * 0.05,
        norm_g=1.0 + 0.1 * jax.random.normal(k6, (hu,), jnp.float32),
        norm_b=0.05 * jax.random.normal(k7, (hu,), jnp.float32),
        gate_w=jax.random.normal(k5, (H, n_head), jnp.float32) * 0.05,
    )

    x = jax.random.normal(kx, (B, L, H), jnp.float32)
    x = x.at[:, :2, :].set(0.0)            # exact zeros exercise the padding mask

    out = ffn_forward(x, params, n_head)
    jax.block_until_ready(out)

    ref = ffn_reference(x, params, n_head)
    assert out.shape == (B, L, H)
    err = float(jnp.max(jnp.abs(out - ref)))
    assert jnp.allclose(out, ref, atol=1e-5, rtol=1e-5), f"max|diff|={err}"
    print("KERNEL_OK")
</pallas_src>

<mosaic_0001>
module attributes {stable_mosaic.version = 11 : i64} {
  func.func @_ffn_kernel(%arg0: i32, %arg1: memref<8x128xf32, #tpu.memory_space<vmem>>, %arg2: memref<128x128xf32, #tpu.memory_space<vmem>>, %arg3: memref<128x128xf32, #tpu.memory_space<vmem>>, %arg4: memref<8x128xf32, #tpu.memory_space<vmem>>, %arg5: memref<128x8xf32, #tpu.memory_space<vmem>>, %arg6: memref<8x128xf32, #tpu.memory_space<vmem>>, %arg7: memref<128x8xf32, #tpu.memory_space<vmem>>, %arg8: memref<8x8xf32, #tpu.memory_space<vmem>>, %arg9: memref<8x128xf32, #tpu.memory_space<vmem>>) attributes {dimension_semantics = [#tpu.dimension_semantics<parallel>], iteration_bounds = array<i64: 1>, scalar_prefetch = 0 : i64, scratch_operands = 0 : i64, tpu.core_type = #tpu.core_type<tc>, window_params = [{transform_indices = @transform_0, window_bounds = array<i64: 8, 128>}, {pipeline_mode = #tpu.pipeline_mode<synchronous>, transform_indices = @transform_1, window_bounds = array<i64: 128, 128>}, {pipeline_mode = #tpu.pipeline_mode<synchronous>, transform_indices = @transform_2, window_bounds = array<i64: 128, 128>}, {pipeline_mode = #tpu.pipeline_mode<synchronous>, transform_indices = @transform_3, window_bounds = array<i64: 8, 128>}, {pipeline_mode = #tpu.pipeline_mode<synchronous>, transform_indices = @transform_4, window_bounds = array<i64: 128, 8>}, {pipeline_mode = #tpu.pipeline_mode<synchronous>, transform_indices = @transform_5, window_bounds = array<i64: 8, 128>}, {pipeline_mode = #tpu.pipeline_mode<synchronous>, transform_indices = @transform_6, window_bounds = array<i64: 128, 8>}, {pipeline_mode = #tpu.pipeline_mode<synchronous>, transform_indices = @transform_7, window_bounds = array<i64: 8, 8>}, {transform_indices = @transform_8, window_bounds = array<i64: 8, 128>}]} {
    %c0 = arith.constant 0 : index
    %c0_0 = arith.constant 0 : index
    %0 = vector.load %arg1[%c0, %c0_0] : memref<8x128xf32, #tpu.memory_space<vmem>>, vector<8x128xf32>
    %cst = arith.constant 0.000000e+00 : f32
    %1 = vector.broadcast %cst : f32 to vector<8x128xf32>
    %2 = arith.cmpf oeq, %0, %1 : vector<8x128xf32>
    %c0_1 = arith.constant 0 : index
    %c0_2 = arith.constant 0 : index
    %3 = vector.load %arg4[%c0_1, %c0_2] : memref<8x128xf32, #tpu.memory_space<vmem>>, vector<1x128xf32>
    %c1 = arith.constant 1 : index
    %c0_3 = arith.constant 0 : index
    %4 = vector.load %arg4[%c1, %c0_3] : memref<8x128xf32, #tpu.memory_space<vmem>>, vector<1x128xf32>
    %c2 = arith.constant 2 : index
    %c0_4 = arith.constant 0 : index
    %5 = vector.load %arg4[%c2, %c0_4] : memref<8x128xf32, #tpu.memory_space<vmem>>, vector<1x128xf32>
    %c3 = arith.constant 3 : index
    %c0_5 = arith.constant 0 : index
    %6 = vector.load %arg4[%c3, %c0_5] : memref<8x128xf32, #tpu.memory_space<vmem>>, vector<1x128xf32>
    %c0_6 = arith.constant 0 : index
    %c0_7 = arith.constant 0 : index
    %7 = vector.load %arg2[%c0_6, %c0_7] : memref<128x128xf32, #tpu.memory_space<vmem>>, vector<128x128xf32>
    %cst_8 = arith.constant dense<0.000000e+00> : vector<8x128xf32>
    %8 = tpu.matmul %0, %7, %cst_8 {dimension_numbers = #tpu.dot_dimension_numbers<[1], [0], [0], [1], [0, 0, 1, 1], [], []>} : vector<8x128xf32>, vector<128x128xf32>, vector<8x128xf32> -> vector<8x128xf32>
    %9 = vector.broadcast %3 : vector<1x128xf32> to vector<8x128xf32>
    %10 = arith.addf %8, %9 : vector<8x128xf32>
    %cst_9 = arith.constant 0.000000e+00 : f32
    %11 = vector.broadcast %cst_9 : f32 to vector<8x128xf32>
    %12 = arith.maximumf %10, %11 : vector<8x128xf32>
    %cst_10 = arith.constant 0.000000e+00 : f32
    %13 = vector.broadcast %cst_10 : f32 to vector<8x128xf32>
    %14 = arith.select %2, %13, %12 : vector<8x128xi1>, vector<8x128xf32>
    %c0_11 = arith.constant 0 : index
    %c0_12 = arith.constant 0 : index
    %15 = vector.load %arg3[%c0_11, %c0_12] : memref<128x128xf32, #tpu.memory_space<vmem>>, vector<128x128xf32>
    %cst_13 = arith.constant dense<0.000000e+00> : vector<8x128xf32>
    %16 = tpu.matmul %14, %15, %cst_13 {dimension_numbers = #tpu.dot_dimension_numbers<[1], [0], [0], [1], [0, 0, 1, 1], [], []>} : vector<8x128xf32>, vector<128x128xf32>, vector<8x128xf32> -> vector<8x128xf32>
    %17 = vector.broadcast %4 : vector<1x128xf32> to vector<8x128xf32>
    %18 = arith.addf %16, %17 : vector<8x128xf32>
    %cst_14 = arith.constant 0.000000e+00 : f32
    %19 = vector.broadcast %cst_14 : f32 to vector<8x128xf32>
    %20 = arith.select %2, %19, %18 : vector<8x128xi1>, vector<8x128xf32>
    %21 = arith.addf %20, %0 : vector<8x128xf32>
    %c0_15 = arith.constant 0 : index
    %c0_16 = arith.constant 0 : index
    %22 = vector.load %arg6[%c0_15, %c0_16] : memref<8x128xf32, #tpu.memory_space<vmem>>, vector<8x128xf32>
    %c0_17 = arith.constant 0 : index
    %c0_18 = arith.constant 0 : index
    %23 = vector.load %arg5[%c0_17, %c0_18] : memref<128x8xf32, #tpu.memory_space<vmem>>, vector<128x8xf32>
    %cst_19 = arith.constant dense<0.000000e+00> : vector<8x8xf32>
    %24 = tpu.matmul %21, %23, %cst_19 {dimension_numbers = #tpu.dot_dimension_numbers<[1], [0], [0], [1], [0, 0, 1, 1], [], []>} : vector<8x128xf32>, vector<128x8xf32>, vector<8x8xf32> -> vector<8x8xf32>
    %25 = arith.mulf %21, %21 : vector<8x128xf32>
    %c0_20 = arith.constant 0 : index
    %c0_21 = arith.constant 0 : index
    %26 = vector.load %arg5[%c0_20, %c0_21] : memref<128x8xf32, #tpu.memory_space<vmem>>, vector<128x8xf32>
    %cst_22 = arith.constant dense<0.000000e+00> : vector<8x8xf32>
    %27 = tpu.matmul %25, %26, %cst_22 {dimension_numbers = #tpu.dot_dimension_numbers<[1], [0], [0], [1], [0, 0, 1, 1], [], []>} : vector<8x128xf32>, vector<128x8xf32>, vector<8x8xf32> -> vector<8x8xf32>
    %28 = arith.mulf %24, %24 : vector<8x8xf32>
    %29 = arith.subf %27, %28 : vector<8x8xf32>
    %cst_23 = arith.constant 0.000000e+00 : f32
    %30 = vector.broadcast %cst_23 : f32 to vector<8x8xf32>
    %31 = arith.maximumf %29, %30 : vector<8x8xf32>
    %cst_24 = arith.constant 9.99999993E-9 : f32
    %32 = vector.broadcast %cst_24 : f32 to vector<8x8xf32>
    %33 = arith.addf %31, %32 : vector<8x8xf32>
    %34 = math.rsqrt %33 : vector<8x8xf32>
    %cst_25 = arith.constant dense<0.000000e+00> : vector<8x128xf32>
    %35 = tpu.matmul %24, %22, %cst_25 {dimension_numbers = #tpu.dot_dimension_numbers<[1], [0], [0], [1], [0, 0, 1, 1], [], []>} : vector<8x8xf32>, vector<8x128xf32>, vector<8x128xf32> -> vector<8x128xf32>
    %cst_26 = arith.constant dense<0.000000e+00> : vector<8x128xf32>
    %36 = tpu.matmul %34, %22, %cst_26 {dimension_numbers = #tpu.dot_dimension_numbers<[1], [0], [0], [1], [0, 0, 1, 1], [], []>} : vector<8x8xf32>, vector<8x128xf32>, vector<8x128xf32> -> vector<8x128xf32>
    %37 = arith.subf %21, %35 : vector<8x128xf32>
    %38 = arith.mulf %37, %36 : vector<8x128xf32>
    %39 = vector.broadcast %5 : vector<1x128xf32> to vector<8x128xf32>
    %40 = arith.mulf %38, %39 : vector<8x128xf32>
    %41 = vector.broadcast %6 : vector<1x128xf32> to vector<8x128xf32>
    %42 = arith.addf %40, %41 : vector<8x128xf32>
    %c0_27 = arith.constant 0 : index
    %c0_28 = arith.constant 0 : index
    %43 = vector.load %arg7[%c0_27, %c0_28] : memref<128x8xf32, #tpu.memory_space<vmem>>, vector<128x8xf32>
    %cst_29 = arith.constant dense<0.000000e+00> : vector<8x8xf32>
    %44 = tpu.matmul %42, %43, %cst_29 {dimension_numbers = #tpu.dot_dimension_numbers<[1], [0], [0], [1], [0, 0, 1, 1], [], []>} : vector<8x128xf32>, vector<128x8xf32>, vector<8x8xf32> -> vector<8x8xf32>
    %cst_30 = arith.constant dense<0xFF800000> : vector<8xf32>
    %45 = vector.multi_reduction <maximumf>, %44, %cst_30 [1] : vector<8x8xf32> to vector<8xf32>
    %46 = vector.shape_cast %45 : vector<8xf32> to vector<8x1xf32>
    %47 = vector.broadcast %46 : vector<8x1xf32> to vector<8x8xf32>
    %48 = arith.subf %44, %47 : vector<8x8xf32>
    %49 = math.exp %48 : vector<8x8xf32>
    %c0_31 = arith.constant 0 : index
    %c0_32 = arith.constant 0 : index
    %50 = vector.load %arg8[%c0_31, %c0_32] : memref<8x8xf32, #tpu.memory_space<vmem>>, vector<8x8xf32>
    %cst_33 = arith.constant dense<0.000000e+00> : vector<8x8xf32>
    %51 = tpu.matmul %49, %50, %cst_33 {dimension_numbers = #tpu.dot_dimension_numbers<[1], [0], [0], [1], [0, 0, 1, 1], [], []>} : vector<8x8xf32>, vector<8x8xf32>, vector<8x8xf32> -> vector<8x8xf32>
    %52 = tpu.reciprocal %51 {approx = true} : vector<8x8xf32> -> vector<8x8xf32>
    %53 = arith.mulf %51, %52 : vector<8x8xf32>
    %cst_34 = arith.constant 2.000000e+00 : f32
    %54 = vector.broadcast %cst_34 : f32 to vector<8x8xf32>
    %55 = arith.subf %54, %53 : vector<8x8xf32>
    %56 = arith.mulf %52, %55 : vector<8x8xf32>
    %57 = arith.mulf %51, %56 : vector<8x8xf32>
    %cst_35 = arith.constant 2.000000e+00 : f32
    %58 = vector.broadcast %cst_35 : f32 to vector<8x8xf32>
    %59 = arith.subf %58, %57 : vector<8x8xf32>
    %60 = arith.mulf %56, %59 : vector<8x8xf32>
    %61 = arith.mulf %49, %60 : vector<8x8xf32>
    %cst_36 = arith.constant dense<0.000000e+00> : vector<8x128xf32>
    %62 = tpu.matmul %61, %22, %cst_36 {dimension_numbers = #tpu.dot_dimension_numbers<[1], [0], [0], [1], [0, 0, 1, 1], [], []>} : vector<8x8xf32>, vector<8x128xf32>, vector<8x128xf32> -> vector<8x128xf32>
    %63 = arith.mulf %42, %62 : vector<8x128xf32>
    %c0_37 = arith.constant 0 : index
    %c0_38 = arith.constant 0 : index
    %64 = vector.load %arg9[%c0_37, %c0_38] : memref<8x128xf32, #tpu.memory_space<vmem>>, vector<8x128xf32>
    tpu.vector_store %arg9[%c0_37, %c0_38], %63 {strides = array<i32>} : memref<8x128xf32, #tpu.memory_space<vmem>>, vector<8x128xf32>,
    return
  }
  func.func @transform_0(%arg0: i32) -> (i32, i32) {
    %c0_i32 = arith.constant 0 : i32
    %c0_i32_0 = arith.constant 0 : i32
    return %arg0, %c0_i32 : i32, i32
  }
  func.func @transform_1(%arg0: i32) -> (i32, i32) {
    %c0_i32 = arith.constant 0 : i32
    %c0_i32_0 = arith.constant 0 : i32
    %c0_i32_1 = arith.constant 0 : i32
    return %c0_i32, %c0_i32_0 : i32, i32
  }
  func.func @transform_2(%arg0: i32) -> (i32, i32) {
    %c0_i32 = arith.constant 0 : i32
    %c0_i32_0 = arith.constant 0 : i32
    %c0_i32_1 = arith.constant 0 : i32
    return %c0_i32, %c0_i32_0 : i32, i32
  }
  func.func @transform_3(%arg0: i32) -> (i32, i32) {
    %c0_i32 = arith.constant 0 : i32
    %c0_i32_0 = arith.constant 0 : i32
    %c0_i32_1 = arith.constant 0 : i32
    return %c0_i32, %c0_i32_0 : i32, i32
  }
  func.func @transform_4(%arg0: i32) -> (i32, i32) {
    %c0_i32 = arith.constant 0 : i32
    %c0_i32_0 = arith.constant 0 : i32
    %c0_i32_1 = arith.constant 0 : i32
    return %c0_i32, %c0_i32_0 : i32, i32
  }
  func.func @transform_5(%arg0: i32) -> (i32, i32) {
    %c0_i32 = arith.constant 0 : i32
    %c0_i32_0 = arith.constant 0 : i32
    %c0_i32_1 = arith.constant 0 : i32
    return %c0_i32, %c0_i32_0 : i32, i32
  }
  func.func @transform_6(%arg0: i32) -> (i32, i32) {
    %c0_i32 = arith.constant 0 : i32
    %c0_i32_0 = arith.constant 0 : i32
    %c0_i32_1 = arith.constant 0 : i32
    return %c0_i32, %c0_i32_0 : i32, i32
  }
  func.func @transform_7(%arg0: i32) -> (i32, i32) {
    %c0_i32 = arith.constant 0 : i32
    %c0_i32_0 = arith.constant 0 : i32
    %c0_i32_1 = arith.constant 0 : i32
    return %c0_i32, %c0_i32_0 : i32, i32
  }
  func.func @transform_8(%arg0: i32) -> (i32, i32) {
    %c0_i32 = arith.constant 0 : i32
    %c0_i32_0 = arith.constant 0 : i32
    return %arg0, %c0_i32 : i32, i32
  }
}

</mosaic_0001>

<llo_original>
// kernel: tpu_custom_call.1
$region0: #{tpu_custom_call.1}
  #allocation0 [shape = 'u32[]', space=smem, size = 0x4, offset = 0x4, fixed_abs, tag = 'smem constant byte address 0x4 - core index']
  #allocation1 [shape = 'u32[144,128]{1,0:T(1,128)}', space=vmem, size = 0x12000, scoped, tag = 'internal scratch']
  %s0 = inlined_call_operand.vmem [shape: f32[8,128], index: 0, kind: input, shape index: {}]
  %s1 = inlined_call_operand.vmem [shape: f32[128,128], index: 1, kind: input, shape index: {}]
  %s2 = inlined_call_operand.vmem [shape: f32[128,128], index: 2, kind: input, shape index: {}]
  %s3 = inlined_call_operand.vmem [shape: f32[8,128], index: 3, kind: input, shape index: {}]
  %s4 = inlined_call_operand.vmem [shape: f32[128,8], index: 4, kind: input, shape index: {}]
  %s5 = inlined_call_operand.vmem [shape: f32[8,128], index: 5, kind: input, shape index: {}]
  %s6 = inlined_call_operand.vmem [shape: f32[128,8], index: 6, kind: input, shape index: {}]
  %s7 = inlined_call_operand.vmem [shape: f32[8,8], index: 7, kind: input, shape index: {}]
  %s8 = inlined_call_operand.hbm [shape: f32[8,128], index: 8, kind: output, shape index: {}]
  %s9 = sld [smem:[#allocation0]]
  $region42: #{tpu_custom_call.1} parent=0
    _
  %s11 = ssub.s32 1, %s9
  %s12 = scalar_select 0, %s11, %s9
  $region1: #{tpu_custom_call.1} parent=0
    #allocation2 [shape = 'u8[4096]{0}', space=vmem, size = 0x1000, scoped, tag = 'output window, operand 0, single buffered']
    #allocation3 [shape = 's32[1]{0}', space=sflag, size = 0x4, scoped, tag = 'scoped memory for tpu_custom_call.1']
    %13 = vsyncpa [#allocation3], 0
    // Predicated region
    $region2: #{tpu_custom_call.1} parent=1 // pred_check
      _
    $region3: #{tpu_custom_call.1} parent=1 // pred_check_branch
      %15 = sbr.rel (0) target = $region5
    $region4: #{tpu_custom_call.1} parent=1 // pred_region
      _
    $region5: #{tpu_custom_call.1} parent=1 // pred_fallthru
      _
    // Predicated region
    $region6: #{tpu_custom_call.1} parent=1 // pred_check
      _
    $region7: #{tpu_custom_call.1} parent=1 // pred_check_branch
      %17 = sbr.rel (0) target = $region9
    $region8: #{tpu_custom_call.1} parent=1 // pred_region
      _
    $region9: #{tpu_custom_call.1} parent=1 // pred_fallthru
      _
    // Predicated region
    $region10: #{tpu_custom_call.1} parent=1 // pred_check
      _
    $region11: #{tpu_custom_call.1} parent=1 // pred_check_branch
      %19 = sbr.rel (0) target = $region13
    $region12: #{tpu_custom_call.1} parent=1 // pred_region
      _
    $region13: #{tpu_custom_call.1} parent=1 // pred_fallthru
      _
    // Predicated region
    $region14: #{tpu_custom_call.1} parent=1 // pred_check
      _
    $region15: #{tpu_custom_call.1} parent=1 // pred_check_branch
      %21 = sbr.rel (0) target = $region17
    $region16: #{tpu_custom_call.1} parent=1 // pred_region
      _
    $region17: #{tpu_custom_call.1} parent=1 // pred_fallthru
      _
    // Predicated region
    $region18: #{tpu_custom_call.1} parent=1 // pred_check
      _
    $region19: #{tpu_custom_call.1} parent=1 // pred_check_branch
      %23 = sbr.rel (0) target = $region21
    $region20: #{tpu_custom_call.1} parent=1 // pred_region
      _
    $region21: #{tpu_custom_call.1} parent=1 // pred_fallthru
      _
    // Predicated region
    $region22: #{tpu_custom_call.1} parent=1 // pred_check
      _
    $region23: #{tpu_custom_call.1} parent=1 // pred_check_branch
      %25 = sbr.rel (0) target = $region25
    $region24: #{tpu_custom_call.1} parent=1 // pred_region
      _
    $region25: #{tpu_custom_call.1} parent=1 // pred_fallthru
      _
    // Predicated region
    $region26: #{tpu_custom_call.1} parent=1 // pred_check
      _
    $region27: #{tpu_custom_call.1} parent=1 // pred_check_branch
      %27 = sbr.rel (0) target = $region29
    $region28: #{tpu_custom_call.1} parent=1 // pred_region
      _
    $region29: #{tpu_custom_call.1} parent=1 // pred_fallthru
      _
    // Predicated region
    $region30: #{tpu_custom_call.1} parent=1 // pred_check
      _
    $region31: #{tpu_custom_call.1} parent=1 // pred_check_branch
      %29 = sbr.rel (0) target = $region33
    $region32: #{tpu_custom_call.1} parent=1 // pred_region
      _
    $region33: #{tpu_custom_call.1} parent=1 // pred_fallthru
      _
    %v30 = vld [vmem:[%s0] sm:$0xff]
    %vm31 = vcmp.eq.f32.partialorder %v30, 0.0
    %v32 = vld [vmem:[%s3] sm:$0x1]
    %v33 = vld [vmem:[%s3 + $0x1] sm:$0x1]
    %v34 = vld [vmem:[%s3 + $0x2] sm:$0x1]
    %v35 = vld [vmem:[%s3 + $0x3] sm:$0x1]
    %v36 = vld [vmem:[%s1] sm:$0xff]
    %v37 = vld [vmem:[%s1 + $0x8] sm:$0xff]
    %v38 = vld [vmem:[%s1 + $0x10] sm:$0xff]
    %v39 = vld [vmem:[%s1 + $0x18] sm:$0xff]
    %v40 = vld [vmem:[%s1 + $0x20] sm:$0xff]
    %v41 = vld [vmem:[%s1 + $0x28] sm:$0xff]
    %v42 = vld [vmem:[%s1 + $0x30] sm:$0xff]
    %v43 = vld [vmem:[%s1 + $0x38] sm:$0xff]
    %v44 = vld [vmem:[%s1 + $0x40] sm:$0xff]
    %v45 = vld [vmem:[%s1 + $0x48] sm:$0xff]
    %v46 = vld [vmem:[%s1 + $0x50] sm:$0xff]
    %v47 = vld [vmem:[%s1 + $0x58] sm:$0xff]
    %v48 = vld [vmem:[%s1 + $0x60] sm:$0xff]
    %v49 = vld [vmem:[%s1 + $0x68] sm:$0xff]
    %v50 = vld [vmem:[%s1 + $0x70] sm:$0xff]
    %v51 = vld [vmem:[%s1 + $0x78] sm:$0xff]
    %v52 = vlaneseq
    %v53 = vshrl.u32 %v52, 7
    %v54 = vsub.s32 0, %v53
    %v55 = vrot.slane %v32, %v54
    %56 = vmatprep.subr.mxu0 0.0
    %57 = vmatpush1.msra.mxu0 %v36
    %58 = vmatprep.subr.mxu0 0.0
    %59 = vmatpush1.msra.mxu0 %v37
    %60 = vmatprep.subr.mxu0 0.0
    %61 = vmatpush1.msra.mxu0 %v38
    %62 = vmatprep.subr.mxu0 0.0
    %63 = vmatpush1.msra.mxu0 %v39
    %64 = vmatprep.subr.mxu0 0.0
    %65 = vmatpush1.msra.mxu0 %v40
    %66 = vmatprep.subr.mxu0 0.0
    %67 = vmatpush1.msra.mxu0 %v41
    %68 = vmatprep.subr.mxu0 0.0
    %69 = vmatpush1.msra.mxu0 %v42
    %70 = vmatprep.subr.mxu0 0.0
    %71 = vmatpush1.msra.mxu0 %v43
    %72 = vmatprep.subr.mxu0 0.0
    %73 = vmatpush1.msra.mxu0 %v44
    %74 = vmatprep.subr.mxu0 0.0
    %75 = vmatpush1.msra.mxu0 %v45
    %76 = vmatprep.subr.mxu0 0.0
    %77 = vmatpush1.msra.mxu0 %v46
    %78 = vmatprep.subr.mxu0 0.0
    %79 = vmatpush1.msra.mxu0 %v47
    %80 = vmatprep.subr.mxu0 0.0
    %81 = vmatpush1.msra.mxu0 %v48
    %82 = vmatprep.subr.mxu0 0.0
    %83 = vmatpush1.msra.mxu0 %v49
    %84 = vmatprep.subr.mxu0 0.0
    %85 = vmatpush1.msra.mxu0 %v50
    %86 = vmatprep.subr.mxu0 0.0
    %87 = vmatpush1.msra.mxu0 %v51
    %88 = vmatprep.subr.mxu0 0.0
    %89 = vmatpush1.msra.mxu0 0.0
    %90 = vmatprep.subr.mxu0 0.0
    %91 = vmatpush1.msra.mxu0 0.0
    %92 = vmatprep.subr.mxu0 0.0
    %93 = vmatpush1.msra.mxu0 0.0
    %94 = vmatprep.subr.mxu0 0.0
    %95 = vmatpush1.msra.mxu0 0.0
    %96 = vmatprep.subr.mxu0 0.0
    %97 = vmatpush1.msra.mxu0 0.0
    %98 = vmatprep.subr.mxu0 0.0
    %99 = vmatpush1.msra.mxu0 0.0
    %100 = vmatprep.subr.mxu0 0.0
    %101 = vmatpush1.msra.mxu0 0.0
    %102 = vmatprep.subr.mxu0 0.0
    %103 = vmatpush1.msra.mxu0 0.0
    %104 = vmatprep.subr.mxu0 0.0
    %105 = vmatpush1.msra.mxu0 0.0
    %106 = vmatprep.subr.mxu0 0.0
    %107 = vmatpush1.msra.mxu0 0.0
    %108 = vmatprep.subr.mxu0 0.0
    %109 = vmatpush1.msra.mxu0 0.0
    %110 = vmatprep.subr.mxu0 0.0
    %111 = vmatpush1.msra.mxu0 0.0
    %112 = vmatprep.subr.mxu0 0.0
    %113 = vmatpush1.msra.mxu0 0.0
    %114 = vmatprep.subr.mxu0 0.0
    %115 = vmatpush1.msra.mxu0 0.0
    %116 = vmatprep.subr.mxu0 0.0
    %117 = vmatpush1.msra.mxu0 0.0
    %118 = vmatprep.subr.mxu0 0.0
    %119 = vmatpush1.msra.mxu0 0.0
    %120 = vmatprep.mubr.f32.mxu0 0.0
    %121 = vmatmul.mubr.f32.gmra.mrb[0].mxu0 %v30
    %v122 = vpop.f32.mrb[0].mxu0
    %v123 = vadd.f32 %v55, %v122
    %v124 = vpop.f32.mrb[0].mxu0
    %125 = vdwg.mxu0
    %v126 = vmax.f32 %v123, 0.0
    %v127 = vsel %vm31, 0.0, %v126
    %v128 = vld [vmem:[%s2] sm:$0xff]
    %v129 = vld [vmem:[%s2 + $0x8] sm:$0xff]
    %v130 = vld [vmem:[%s2 + $0x10] sm:$0xff]
    %v131 = vld [vmem:[%s2 + $0x18] sm:$0xff]
    %v132 = vld [vmem:[%s2 + $0x20] sm:$0xff]
    %v133 = vld [vmem:[%s2 + $0x28] sm:$0xff]
    %v134 = vld [vmem:[%s2 + $0x30] sm:$0xff]
    %v135 = vld [vmem:[%s2 + $0x38] sm:$0xff]
    %v136 = vld [vmem:[%s2 + $0x40] sm:$0xff]
    %v137 = vld [vmem:[%s2 + $0x48] sm:$0xff]
    %v138 = vld [vmem:[%s2 + $0x50] sm:$0xff]
    %v139 = vld [vmem:[%s2 + $0x58] sm:$0xff]
    %v140 = vld [vmem:[%s2 + $0x60] sm:$0xff]
    %v141 = vld [vmem:[%s2 + $0x68] sm:$0xff]
    %v142 = vld [vmem:[%s2 + $0x70] sm:$0xff]
    %v143 = vld [vmem:[%s2 + $0x78] sm:$0xff]
    %v144 = vlaneseq
    %v145 = vshrl.u32 %v144, 7
    %v146 = vsub.s32 0, %v145
    %v147 = vrot.slane %v33, %v146
    %148 = vmatprep.subr.mxu0 0.0
    %149 = vmatpush1.msra.mxu0 %v128
    %150 = vmatprep.subr.mxu0 0.0
    %151 = vmatpush1.msra.mxu0 %v129
    %152 = vmatprep.subr.mxu0 0.0
    %153 = vmatpush1.msra.mxu0 %v130
    %154 = vmatprep.subr.mxu0 0.0
    %155 = vmatpush1.msra.mxu0 %v131
    %156 = vmatprep.subr.mxu0 0.0
    %157 = vmatpush1.msra.mxu0 %v132
    %158 = vmatprep.subr.mxu0 0.0
    %159 = vmatpush1.msra.mxu0 %v133
    %160 = vmatprep.subr.mxu0 0.0
    %161 = vmatpush1.msra.mxu0 %v134
    %162 = vmatprep.subr.mxu0 0.0
    %163 = vmatpush1.msra.mxu0 %v135
    %164 = vmatprep.subr.mxu0 0.0
    %165 = vmatpush1.msra.mxu0 %v136
    %166 = vmatprep.subr.mxu0 0.0
    %167 = vmatpush1.msra.mxu0 %v137
    %168 = vmatprep.subr.mxu0 0.0
    %169 = vmatpush1.msra.mxu0 %v138
    %170 = vmatprep.subr.mxu0 0.0
    %171 = vmatpush1.msra.mxu0 %v139
    %172 = vmatprep.subr.mxu0 0.0
    %173 = vmatpush1.msra.mxu0 %v140
    %174 = vmatprep.subr.mxu0 0.0
    %175 = vmatpush1.msra.mxu0 %v141
    %176 = vmatprep.subr.mxu0 0.0
    %177 = vmatpush1.msra.mxu0 %v142
    %178 = vmatprep.subr.mxu0 0.0
    %179 = vmatpush1.msra.mxu0 %v143
    %180 = vmatprep.subr.mxu0 0.0
    %181 = vmatpush1.msra.mxu0 0.0
    %182 = vmatprep.subr.mxu0 0.0
    %183 = vmatpush1.msra.mxu0 0.0
    %184 = vmatprep.subr.mxu0 0.0
    %185 = vmatpush1.msra.mxu0 0.0
    %186 = vmatprep.subr.mxu0 0.0
    %187 = vmatpush1.msra.mxu0 0.0
    %188 = vmatprep.subr.mxu0 0.0
    %189 = vmatpush1.msra.mxu0 0.0
    %190 = vmatprep.subr.mxu0 0.0
    %191 = vmatpush1.msra.mxu0 0.0
    %192 = vmatprep.subr.mxu0 0.0
    %193 = vmatpush1.msra.mxu0 0.0
    %194 = vmatprep.subr.mxu0 0.0
    %195 = vmatpush1.msra.mxu0 0.0
    %196 = vmatprep.subr.mxu0 0.0
    %197 = vmatpush1.msra.mxu0 0.0
    %198 = vmatprep.subr.mxu0 0.0
    %199 = vmatpush1.msra.mxu0 0.0
    %200 = vmatprep.subr.mxu0 0.0
    %201 = vmatpush1.msra.mxu0 0.0
    %202 = vmatprep.subr.mxu0 0.0
    %203 = vmatpush1.msra.mxu0 0.0
    %204 = vmatprep.subr.mxu0 0.0
    %205 = vmatpush1.msra.mxu0 0.0
    %206 = vmatprep.subr.mxu0 0.0
    %207 = vmatpush1.msra.mxu0 0.0
    %208 = vmatprep.subr.mxu0 0.0
    %209 = vmatpush1.msra.mxu0 0.0
    %210 = vmatprep.subr.mxu0 0.0
    %211 = vmatpush1.msra.mxu0 0.0
    %212 = vmatprep.mubr.f32.mxu0 0.0
    %213 = vmatmul.mubr.f32.gmra.mrb[0].mxu0 %v127
    %v214 = vpop.f32.mrb[0].mxu0
    %v215 = vadd.f32 %v147, %v214
    %v216 = vpop.f32.mrb[0].mxu0
    %217 = vdwg.mxu0
    %v218 = vsel %vm31, 0.0, %v215
    %v219 = vadd.f32 %v218, %v30
    %v220 = vld [vmem:[%s5] sm:$0xff]
    %v221 = vld [vmem:[%s4] sm:$0xff]
    %v222 = vld [vmem:[%s4 + $0x8] sm:$0xff]
    %v223 = vld [vmem:[%s4 + $0x10] sm:$0xff]
    %v224 = vld [vmem:[%s4 + $0x18] sm:$0xff]
    %v225 = vld [vmem:[%s4 + $0x20] sm:$0xff]
    %v226 = vld [vmem:[%s4 + $0x28] sm:$0xff]
    %v227 = vld [vmem:[%s4 + $0x30] sm:$0xff]
    %v228 = vld [vmem:[%s4 + $0x38] sm:$0xff]
    %v229 = vld [vmem:[%s4 + $0x40] sm:$0xff]
    %v230 = vld [vmem:[%s4 + $0x48] sm:$0xff]
    %v231 = vld [vmem:[%s4 + $0x50] sm:$0xff]
    %v232 = vld [vmem:[%s4 + $0x58] sm:$0xff]
    %v233 = vld [vmem:[%s4 + $0x60] sm:$0xff]
    %v234 = vld [vmem:[%s4 + $0x68] sm:$0xff]
    %v235 = vld [vmem:[%s4 + $0x70] sm:$0xff]
    %v236 = vld [vmem:[%s4 + $0x78] sm:$0xff]
    %237 = vmatprep.subr.mxu0 0.0
    %238 = vmatpush1.msra.mxu0 %v221
    %239 = vmatprep.subr.mxu0 0.0
    %240 = vmatpush1.msra.mxu0 %v222
    %241 = vmatprep.subr.mxu0 0.0
    %242 = vmatpush1.msra.mxu0 %v223
    %243 = vmatprep.subr.mxu0 0.0
    %244 = vmatpush1.msra.mxu0 %v224
    %245 = vmatprep.subr.mxu0 0.0
    %246 = vmatpush1.msra.mxu0 %v225
    %247 = vmatprep.subr.mxu0 0.0
    %248 = vmatpush1.msra.mxu0 %v226
    %249 = vmatprep.subr.mxu0 0.0
    %250 = vmatpush1.msra.mxu0 %v227
    %251 = vmatprep.subr.mxu0 0.0
    %252 = vmatpush1.msra.mxu0 %v228
    %253 = vmatprep.subr.mxu0 0.0
    %254 = vmatpush1.msra.mxu0 %v229
    %255 = vmatprep.subr.mxu0 0.0
    %256 = vmatpush1.msra.mxu0 %v230
    %257 = vmatprep.subr.mxu0 0.0
    %258 = vmatpush1.msra.mxu0 %v231
    %259 = vmatprep.subr.mxu0 0.0
    %260 = vmatpush1.msra.mxu0 %v232
    %261 = vmatprep.subr.mxu0 0.0
    %262 = vmatpush1.msra.mxu0 %v233
    %263 = vmatprep.subr.mxu0 0.0
    %264 = vmatpush1.msra.mxu0 %v234
    %265 = vmatprep.subr.mxu0 0.0
    %266 = vmatpush1.msra.mxu0 %v235
    %267 = vmatprep.subr.mxu0 0.0
    %268 = vmatpush1.msra.mxu0 %v236
    %269 = vmatprep.subr.mxu0 0.0
    %270 = vmatpush1.msra.mxu0 0.0
    %271 = vmatprep.subr.mxu0 0.0
    %272 = vmatpush1.msra.mxu0 0.0
    %273 = vmatprep.subr.mxu0 0.0
    %274 = vmatpush1.msra.mxu0 0.0
    %275 = vmatprep.subr.mxu0 0.0
    %276 = vmatpush1.msra.mxu0 0.0
    %277 = vmatprep.subr.mxu0 0.0
    %278 = vmatpush1.msra.mxu0 0.0
    %279 = vmatprep.subr.mxu0 0.0
    %280 = vmatpush1.msra.mxu0 0.0
    %281 = vmatprep.subr.mxu0 0.0
    %282 = vmatpush1.msra.mxu0 0.0
    %283 = vmatprep.subr.mxu0 0.0
    %284 = vmatpush1.msra.mxu0 0.0
    %285 = vmatprep.subr.mxu0 0.0
    %286 = vmatpush1.msra.mxu0 0.0
    %287 = vmatprep.subr.mxu0 0.0
    %288 = vmatpush1.msra.mxu0 0.0
    %289 = vmatprep.subr.mxu0 0.0
    %290 = vmatpush1.msra.mxu0 0.0
    %291 = vmatprep.subr.mxu0 0.0
    %292 = vmatpush1.msra.mxu0 0.0
    %293 = vmatprep.subr.mxu0 0.0
    %294 = vmatpush1.msra.mxu0 0.0
    %295 = vmatprep.subr.mxu0 0.0
    %296 = vmatpush1.msra.mxu0 0.0
    %297 = vmatprep.subr.mxu0 0.0
    %298 = vmatpush1.msra.mxu0 0.0
    %299 = vmatprep.subr.mxu0 0.0
    %300 = vmatpush1.msra.mxu0 0.0
    %301 = vmatprep.mubr.f32.mxu0 0.0
    %302 = vmatmul.mubr.f32.gmra.mrb[0].mxu0 %v219
    %v303 = vpop.f32.mrb[0].mxu0
    %v304 = vadd.f32 0.0, %v303
    %v305 = vpop.f32.mrb[0].mxu0
    %306 = vdwg.mxu0
    %v307 = vmul.f32 %v219, %v219
    %308 = vmatprep.subr.mxu0 0.0
    %309 = vmatpush1.msra.mxu0 %v221
    %310 = vmatprep.subr.mxu0 0.0
    %311 = vmatpush1.msra.mxu0 %v222
    %312 = vmatprep.subr.mxu0 0.0
    %313 = vmatpush1.msra.mxu0 %v223
    %314 = vmatprep.subr.mxu0 0.0
    %315 = vmatpush1.msra.mxu0 %v224
    %316 = vmatprep.subr.mxu0 0.0
    %317 = vmatpush1.msra.mxu0 %v225
    %318 = vmatprep.subr.mxu0 0.0
    %319 = vmatpush1.msra.mxu0 %v226
    %320 = vmatprep.subr.mxu0 0.0
    %321 = vmatpush1.msra.mxu0 %v227
    %322 = vmatprep.subr.mxu0 0.0
    %323 = vmatpush1.msra.mxu0 %v228
    %324 = vmatprep.subr.mxu0 0.0
    %325 = vmatpush1.msra.mxu0 %v229
    %326 = vmatprep.subr.mxu0 0.0
    %327 = vmatpush1.msra.mxu0 %v230
    %328 = vmatprep.subr.mxu0 0.0
    %329 = vmatpush1.msra.mxu0 %v231
    %330 = vmatprep.subr.mxu0 0.0
    %331 = vmatpush1.msra.mxu0 %v232
    %332 = vmatprep.subr.mxu0 0.0
    %333 = vmatpush1.msra.mxu0 %v233
    %334 = vmatprep.subr.mxu0 0.0
    %335 = vmatpush1.msra.mxu0 %v234
    %336 = vmatprep.subr.mxu0 0.0
    %337 = vmatpush1.msra.mxu0 %v235
    %338 = vmatprep.subr.mxu0 0.0
    %339 = vmatpush1.msra.mxu0 %v236
    %340 = vmatprep.subr.mxu0 0.0
    %341 = vmatpush1.msra.mxu0 0.0
    %342 = vmatprep.subr.mxu0 0.0
    %343 = vmatpush1.msra.mxu0 0.0
    %344 = vmatprep.subr.mxu0 0.0
    %345 = vmatpush1.msra.mxu0 0.0
    %346 = vmatprep.subr.mxu0 0.0
    %347 = vmatpush1.msra.mxu0 0.0
    %348 = vmatprep.subr.mxu0 0.0
    %349 = vmatpush1.msra.mxu0 0.0
    %350 = vmatprep.subr.mxu0 0.0
    %351 = vmatpush1.msra.mxu0 0.0
    %352 = vmatprep.subr.mxu0 0.0
    %353 = vmatpush1.msra.mxu0 0.0
    %354 = vmatprep.subr.mxu0 0.0
    %355 = vmatpush1.msra.mxu0 0.0
    %356 = vmatprep.subr.mxu0 0.0
    %357 = vmatpush1.msra.mxu0 0.0
    %358 = vmatprep.subr.mxu0 0.0
    %359 = vmatpush1.msra.mxu0 0.0
    %360 = vmatprep.subr.mxu0 0.0
    %361 = vmatpush1.msra.mxu0 0.0
    %362 = vmatprep.subr.mxu0 0.0
    %363 = vmatpush1.msra.mxu0 0.0
    %364 = vmatprep.subr.mxu0 0.0
    %365 = vmatpush1.msra.mxu0 0.0
    %366 = vmatprep.subr.mxu0 0.0
    %367 = vmatpush1.msra.mxu0 0.0
    %368 = vmatprep.subr.mxu0 0.0
    %369 = vmatpush1.msra.mxu0 0.0
    %370 = vmatprep.subr.mxu0 0.0
    %371 = vmatpush1.msra.mxu0 0.0
    %372 = vmatprep.mubr.f32.mxu0 0.0
    %373 = vmatmul.mubr.f32.gmra.mrb[0].mxu0 %v307
    %v374 = vpop.f32.mrb[0].mxu0
    %v375 = vadd.f32 0.0, %v374
    %v376 = vpop.f32.mrb[0].mxu0
    %377 = vdwg.mxu0
    %v378 = vmul.f32 %v304, %v304
    %v379 = vsub.f32 %v375, %v378
    %v380 = vmax.f32 %v379, 0.0
    %v381 = vadd.f32 %v380, 1e-08
    %v382 = vrsqrt.pop %v381
    %vm383 = vcmask 64512
    %v385 = vsel %vm383, %v304, 0
    %387 = vmatprep.subr.mxu0 0.0
    %388 = vmatpush1.msra.mxu0 %v220
    %389 = vmatprep.subr.mxu0 0.0
    %390 = vmatpush1.msra.mxu0 0.0
    %391 = vmatprep.subr.mxu0 0.0
    %392 = vmatpush1.msra.mxu0 0.0
    %393 = vmatprep.subr.mxu0 0.0
    %394 = vmatpush1.msra.mxu0 0.0
    %395 = vmatprep.subr.mxu0 0.0
    %396 = vmatpush1.msra.mxu0 0.0
    %397 = vmatprep.subr.mxu0 0.0
    %398 = vmatpush1.msra.mxu0 0.0
    %399 = vmatprep.subr.mxu0 0.0
    %400 = vmatpush1.msra.mxu0 0.0
    %401 = vmatprep.subr.mxu0 0.0
    %402 = vmatpush1.msra.mxu0 0.0
    %403 = vmatprep.subr.mxu0 0.0
    %404 = vmatpush1.msra.mxu0 0.0
    %405 = vmatprep.subr.mxu0 0.0
    %406 = vmatpush1.msra.mxu0 0.0
    %407 = vmatprep.subr.mxu0 0.0
    %408 = vmatpush1.msra.mxu0 0.0
    %409 = vmatprep.subr.mxu0 0.0
    %410 = vmatpush1.msra.mxu0 0.0
    %411 = vmatprep.subr.mxu0 0.0
    %412 = vmatpush1.msra.mxu0 0.0
    %413 = vmatprep.subr.mxu0 0.0
    %414 = vmatpush1.msra.mxu0 0.0
    %415 = vmatprep.subr.mxu0 0.0
    %416 = vmatpush1.msra.mxu0 0.0
    %417 = vmatprep.subr.mxu0 0.0
    %418 = vmatpush1.msra.mxu0 0.0
    %419 = vmatprep.subr.mxu0 0.0
    %420 = vmatpush1.msra.mxu0 0.0
    %421 = vmatprep.subr.mxu0 0.0
    %422 = vmatpush1.msra.mxu0 0.0
    %423 = vmatprep.subr.mxu0 0.0
    %424 = vmatpush1.msra.mxu0 0.0
    %425 = vmatprep.subr.mxu0 0.0
    %426 = vmatpush1.msra.mxu0 0.0
    %427 = vmatprep.subr.mxu0 0.0
    %428 = vmatpush1.msra.mxu0 0.0
    %429 = vmatprep.subr.mxu0 0.0
    %430 = vmatpush1.msra.mxu0 0.0
    %431 = vmatprep.subr.mxu0 0.0
    %432 = vmatpush1.msra.mxu0 0.0
    %433 = vmatprep.subr.mxu0 0.0
    %434 = vmatpush1.msra.mxu0 0.0
    %435 = vmatprep.subr.mxu0 0.0
    %436 = vmatpush1.msra.mxu0 0.0
    %437 = vmatprep.subr.mxu0 0.0
    %438 = vmatpush1.msra.mxu0 0.0
    %439 = vmatprep.subr.mxu0 0.0
    %440 = vmatpush1.msra.mxu0 0.0
    %441 = vmatprep.subr.mxu0 0.0
    %442 = vmatpush1.msra.mxu0 0.0
    %443 = vmatprep.subr.mxu0 0.0
    %444 = vmatpush1.msra.mxu0 0.0
    %445 = vmatprep.subr.mxu0 0.0
    %446 = vmatpush1.msra.mxu0 0.0
    %447 = vmatprep.subr.mxu0 0.0
    %448 = vmatpush1.msra.mxu0 0.0
    %449 = vmatprep.subr.mxu0 0.0
    %450 = vmatpush1.msra.mxu0 0.0
    %451 = vmatprep.mubr.f32.mxu0 0.0
    %452 = vmatmul.mubr.f32.gmra.mrb[0].mxu0 %v385
    %v453 = vpop.f32.mrb[0].mxu0
    %v454 = vadd.f32 0.0, %v453
    %v455 = vpop.f32.mrb[0].mxu0
    %456 = vdwg.mxu0
    %v458 = vsel %vm383, %v382, 0
    %460 = vmatprep.subr.mxu0 0.0
    %461 = vmatpush1.msra.mxu0 %v220
    %462 = vmatprep.subr.mxu0 0.0
    %463 = vmatpush1.msra.mxu0 0.0
    %464 = vmatprep.subr.mxu0 0.0
    %465 = vmatpush1.msra.mxu0 0.0
    %466 = vmatprep.subr.mxu0 0.0
    %467 = vmatpush1.msra.mxu0 0.0
    %468 = vmatprep.subr.mxu0 0.0
    %469 = vmatpush1.msra.mxu0 0.0
    %470 = vmatprep.subr.mxu0 0.0
    %471 = vmatpush1.msra.mxu0 0.0
    %472 = vmatprep.subr.mxu0 0.0
    %473 = vmatpush1.msra.mxu0 0.0
    %474 = vmatprep.subr.mxu0 0.0
    %475 = vmatpush1.msra.mxu0 0.0
    %476 = vmatprep.subr.mxu0 0.0
    %477 = vmatpush1.msra.mxu0 0.0
    %478 = vmatprep.subr.mxu0 0.0
    %479 = vmatpush1.msra.mxu0 0.0
    %480 = vmatprep.subr.mxu0 0.0
    %481 = vmatpush1.msra.mxu0 0.0
    %482 = vmatprep.subr.mxu0 0.0
    %483 = vmatpush1.msra.mxu0 0.0
    %484 = vmatprep.subr.mxu0 0.0
    %485 = vmatpush1.msra.mxu0 0.0
    %486 = vmatprep.subr.mxu0 0.0
    %487 = vmatpush1.msra.mxu0 0.0
    %488 = vmatprep.subr.mxu0 0.0
    %489 = vmatpush1.msra.mxu0 0.0
    %490 = vmatprep.subr.mxu0 0.0
    %491 = vmatpush1.msra.mxu0 0.0
    %492 = vmatprep.subr.mxu0 0.0
    %493 = vmatpush1.msra.mxu0 0.0
    %494 = vmatprep.subr.mxu0 0.0
    %495 = vmatpush1.msra.mxu0 0.0
    %496 = vmatprep.subr.mxu0 0.0
    %497 = vmatpush1.msra.mxu0 0.0
    %498 = vmatprep.subr.mxu0 0.0
    %499 = vmatpush1.msra.mxu0 0.0
    %500 = vmatprep.subr.mxu0 0.0
    %501 = vmatpush1.msra.mxu0 0.0
    %502 = vmatprep.subr.mxu0 0.0
    %503 = vmatpush1.msra.mxu0 0.0
    %504 = vmatprep.subr.mxu0 0.0
    %505 = vmatpush1.msra.mxu0 0.0
    %506 = vmatprep.subr.mxu0 0.0
    %507 = vmatpush1.msra.mxu0 0.0
    %508 = vmatprep.subr.mxu0 0.0
    %509 = vmatpush1.msra.mxu0 0.0
    %510 = vmatprep.subr.mxu0 0.0
    %511 = vmatpush1.msra.mxu0 0.0
    %512 = vmatprep.subr.mxu0 0.0
    %513 = vmatpush1.msra.mxu0 0.0
    %514 = vmatprep.subr.mxu0 0.0
    %515 = vmatpush1.msra.mxu0 0.0
    %516 = vmatprep.subr.mxu0 0.0
    %517 = vmatpush1.msra.mxu0 0.0
    %518 = vmatprep.subr.mxu0 0.0
    %519 = vmatpush1.msra.mxu0 0.0
    %520 = vmatprep.subr.mxu0 0.0
    %521 = vmatpush1.msra.mxu0 0.0
    %522 = vmatprep.subr.mxu0 0.0
    %523 = vmatpush1.msra.mxu0 0.0
    %524 = vmatprep.mubr.f32.mxu0 0.0
    %525 = vmatmul.mubr.f32.gmra.mrb[0].mxu0 %v458
    %v526 = vpop.f32.mrb[0].mxu0
    %v527 = vadd.f32 0.0, %v526
    %v528 = vpop.f32.mrb[0].mxu0
    %529 = vdwg.mxu0
    %v530 = vsub.f32 %v219, %v454
    %v531 = vmul.f32 %v530, %v527
    %v532 = vlaneseq
    %v533 = vshrl.u32 %v532, 7
    %v534 = vsub.s32 0, %v533
    %v535 = vrot.slane %v34, %v534
    %v536 = vmul.f32 %v531, %v535
    %v537 = vlaneseq
    %v538 = vshrl.u32 %v537, 7
    %v539 = vsub.s32 0, %v538
    %v540 = vrot.slane %v35, %v539
    %v541 = vadd.f32 %v536, %v540
    %v542 = vld [vmem:[%s6] sm:$0xff]
    %v543 = vld [vmem:[%s6 + $0x8] sm:$0xff]
    %v544 = vld [vmem:[%s6 + $0x10] sm:$0xff]
    %v545 = vld [vmem:[%s6 + $0x18] sm:$0xff]
    %v546 = vld [vmem:[%s6 + $0x20] sm:$0xff]
    %v547 = vld [vmem:[%s6 + $0x28] sm:$0xff]
    %v548 = vld [vmem:[%s6 + $0x30] sm:$0xff]
    %v549 = vld [vmem:[%s6 + $0x38] sm:$0xff]
    %v550 = vld [vmem:[%s6 + $0x40] sm:$0xff]
    %v551 = vld [vmem:[%s6 + $0x48] sm:$0xff]
    %v552 = vld [vmem:[%s6 + $0x50] sm:$0xff]
    %v553 = vld [vmem:[%s6 + $0x58] sm:$0xff]
    %v554 = vld [vmem:[%s6 + $0x60] sm:$0xff]
    %v555 = vld [vmem:[%s6 + $0x68] sm:$0xff]
    %v556 = vld [vmem:[%s6 + $0x70] sm:$0xff]
    %v557 = vld [vmem:[%s6 + $0x78] sm:$0xff]
    %558 = vmatprep.subr.mxu0 0.0
    %559 = vmatpush1.msra.mxu0 %v542
    %560 = vmatprep.subr.mxu0 0.0
    %561 = vmatpush1.msra.mxu0 %v543
    %562 = vmatprep.subr.mxu0 0.0
    %563 = vmatpush1.msra.mxu0 %v544
    %564 = vmatprep.subr.mxu0 0.0
    %565 = vmatpush1.msra.mxu0 %v545
    %566 = vmatprep.subr.mxu0 0.0
    %567 = vmatpush1.msra.mxu0 %v546
    %568 = vmatprep.subr.mxu0 0.0
    %569 = vmatpush1.msra.mxu0 %v547
    %570 = vmatprep.subr.mxu0 0.0
    %571 = vmatpush1.msra.mxu0 %v548
    %572 = vmatprep.subr.mxu0 0.0
    %573 = vmatpush1.msra.mxu0 %v549
    %574 = vmatprep.subr.mxu0 0.0
    %575 = vmatpush1.msra.mxu0 %v550
    %576 = vmatprep.subr.mxu0 0.0
    %577 = vmatpush1.msra.mxu0 %v551
    %578 = vmatprep.subr.mxu0 0.0
    %579 = vmatpush1.msra.mxu0 %v552
    %580 = vmatprep.subr.mxu0 0.0
    %581 = vmatpush1.msra.mxu0 %v553
    %582 = vmatprep.subr.mxu0 0.0
    %583 = vmatpush1.msra.mxu0 %v554
    %584 = vmatprep.subr.mxu0 0.0
    %585 = vmatpush1.msra.mxu0 %v555
    %586 = vmatprep.subr.mxu0 0.0
    %587 = vmatpush1.msra.mxu0 %v556
    %588 = vmatprep.subr.mxu0 0.0
    %589 = vmatpush1.msra.mxu0 %v557
    %590 = vmatprep.subr.mxu0 0.0
    %591 = vmatpush1.msra.mxu0 0.0
    %592 = vmatprep.subr.mxu0 0.0
    %593 = vmatpush1.msra.mxu0 0.0
    %594 = vmatprep.subr.mxu0 0.0
    %595 = vmatpush1.msra.mxu0 0.0
    %596 = vmatprep.subr.mxu0 0.0
    %597 = vmatpush1.msra.mxu0 0.0
    %598 = vmatprep.subr.mxu0 0.0
    %599 = vmatpush1.msra.mxu0 0.0
    %600 = vmatprep.subr.mxu0 0.0
    %601 = vmatpush1.msra.mxu0 0.0
    %602 = vmatprep.subr.mxu0 0.0
    %603 = vmatpush1.msra.mxu0 0.0
    %604 = vmatprep.subr.mxu0 0.0
    %605 = vmatpush1.msra.mxu0 0.0
    %606 = vmatprep.subr.mxu0 0.0
    %607 = vmatpush1.msra.mxu0 0.0
    %608 = vmatprep.subr.mxu0 0.0
    %609 = vmatpush1.msra.mxu0 0.0
    %610 = vmatprep.subr.mxu0 0.0
    %611 = vmatpush1.msra.mxu0 0.0
    %612 = vmatprep.subr.mxu0 0.0
    %613 = vmatpush1.msra.mxu0 0.0
    %614 = vmatprep.subr.mxu0 0.0
    %615 = vmatpush1.msra.mxu0 0.0
    %616 = vmatprep.subr.mxu0 0.0
    %617 = vmatpush1.msra.mxu0 0.0
    %618 = vmatprep.subr.mxu0 0.0
    %619 = vmatpush1.msra.mxu0 0.0
    %620 = vmatprep.subr.mxu0 0.0
    %621 = vmatpush1.msra.mxu0 0.0
    %622 = vmatprep.mubr.f32.mxu0 0.0
    %623 = vmatmul.mubr.f32.gmra.mrb[0].mxu0 %v541
    %v624 = vpop.f32.mrb[0].mxu0
    %v625 = vadd.f32 0.0, %v624
    %v626 = vpop.f32.mrb[0].mxu0
    %627 = vdwg.mxu0
    %v628 = vsel %vm383, %v625, -inf
    %629 = vmax.xlane.f32.xlu0 %v628
    %v630 = vpop.xlane.xlu0 %629
    %v631 = vsub.f32 %v625, %v630
    %v632 = vmul.f32 %v631, 1.442695
    %v633 = vpow.pop %v632
    %v634 = vld [vmem:[%s7] sm:$0xff]
    %v636 = vsel %vm383, %v633, 0
    %638 = vmatprep.subr.mxu0 0.0
    %639 = vmatpush1.msra.mxu0 %v634
    %640 = vmatprep.subr.mxu0 0.0
    %641 = vmatpush1.msra.mxu0 0.0
    %642 = vmatprep.subr.mxu0 0.0
    %643 = vmatpush1.msra.mxu0 0.0
    %644 = vmatprep.subr.mxu0 0.0
    %645 = vmatpush1.msra.mxu0 0.0
    %646 = vmatprep.subr.mxu0 0.0
    %647 = vmatpush1.msra.mxu0 0.0
    %648 = vmatprep.subr.mxu0 0.0
    %649 = vmatpush1.msra.mxu0 0.0
    %650 = vmatprep.subr.mxu0 0.0
    %651 = vmatpush1.msra.mxu0 0.0
    %652 = vmatprep.subr.mxu0 0.0
    %653 = vmatpush1.msra.mxu0 0.0
    %654 = vmatprep.subr.mxu0 0.0
    %655 = vmatpush1.msra.mxu0 0.0
    %656 = vmatprep.subr.mxu0 0.0
    %657 = vmatpush1.msra.mxu0 0.0
    %658 = vmatprep.subr.mxu0 0.0
    %659 = vmatpush1.msra.mxu0 0.0
    %660 = vmatprep.subr.mxu0 0.0
    %661 = vmatpush1.msra.mxu0 0.0
    %662 = vmatprep.subr.mxu0 0.0
    %663 = vmatpush1.msra.mxu0 0.0
    %664 = vmatprep.subr.mxu0 0.0
    %665 = vmatpush1.msra.mxu0 0.0
    %666 = vmatprep.subr.mxu0 0.0
    %667 = vmatpush1.msra.mxu0 0.0
    %668 = vmatprep.subr.mxu0 0.0
    %669 = vmatpush1.msra.mxu0 0.0
    %670 = vmatprep.subr.mxu0 0.0
    %671 = vmatpush1.msra.mxu0 0.0
    %672 = vmatprep.subr.mxu0 0.0
    %673 = vmatpush1.msra.mxu0 0.0
    %674 = vmatprep.subr.mxu0 0.0
    %675 = vmatpush1.msra.mxu0 0.0
    %676 = vmatprep.subr.mxu0 0.0
    %677 = vmatpush1.msra.mxu0 0.0
    %678 = vmatprep.subr.mxu0 0.0
    %679 = vmatpush1.msra.mxu0 0.0
    %680 = vmatprep.subr.mxu0 0.0
    %681 = vmatpush1.msra.mxu0 0.0
    %682 = vmatprep.subr.mxu0 0.0
    %683 = vmatpush1.msra.mxu0 0.0
    %684 = vmatprep.subr.mxu0 0.0
    %685 = vmatpush1.msra.mxu0 0.0
    %686 = vmatprep.subr.mxu0 0.0
    %687 = vmatpush1.msra.mxu0 0.0
    %688 = vmatprep.subr.mxu0 0.0
    %689 = vmatpush1.msra.mxu0 0.0
    %690 = vmatprep.subr.mxu0 0.0
    %691 = vmatpush1.msra.mxu0 0.0
    %692 = vmatprep.subr.mxu0 0.0
    %693 = vmatpush1.msra.mxu0 0.0
    %694 = vmatprep.subr.mxu0 0.0
    %695 = vmatpush1.msra.mxu0 0.0
    %696 = vmatprep.subr.mxu0 0.0
    %697 = vmatpush1.msra.mxu0 0.0
    %698 = vmatprep.subr.mxu0 0.0
    %699 = vmatpush1.msra.mxu0 0.0
    %700 = vmatprep.subr.mxu0 0.0
    %701 = vmatpush1.msra.mxu0 0.0
    %702 = vmatprep.mubr.f32.mxu0 0.0
    %703 = vmatmul.mubr.f32.gmra.mrb[0].mxu0 %v636
    %v704 = vpop.f32.mrb[0].mxu0
    %v705 = vadd.f32 0.0, %v704
    %v706 = vpop.f32.mrb[0].mxu0
    %707 = vdwg.mxu0
    %v708 = vrcp.pop %v705
    %v709 = vmul.f32 %v705, %v708
    %v710 = vsub.f32 2.0, %v709
    %v711 = vmul.f32 %v708, %v710
    %v712 = vmul.f32 %v705, %v711
    %v713 = vsub.f32 2.0, %v712
    %v714 = vmul.f32 %v711, %v713
    %v715 = vmul.f32 %v633, %v714
    %v717 = vsel %vm383, %v715, 0
    %719 = vmatprep.subr.mxu0 0.0
    %720 = vmatpush1.msra.mxu0 %v220
    %721 = vmatprep.subr.mxu0 0.0
    %722 = vmatpush1.msra.mxu0 0.0
    %723 = vmatprep.subr.mxu0 0.0
    %724 = vmatpush1.msra.mxu0 0.0
    %725 = vmatprep.subr.mxu0 0.0
    %726 = vmatpush1.msra.mxu0 0.0
    %727 = vmatprep.subr.mxu0 0.0
    %728 = vmatpush1.msra.mxu0 0.0
    %729 = vmatprep.subr.mxu0 0.0
    %730 = vmatpush1.msra.mxu0 0.0
    %731 = vmatprep.subr.mxu0 0.0
    %732 = vmatpush1.msra.mxu0 0.0
    %733 = vmatprep.subr.mxu0 0.0
    %734 = vmatpush1.msra.mxu0 0.0
    %735 = vmatprep.subr.mxu0 0.0
    %736 = vmatpush1.msra.mxu0 0.0
    %737 = vmatprep.subr.mxu0 0.0
    %738 = vmatpush1.msra.mxu0 0.0
    %739 = vmatprep.subr.mxu0 0.0
    %740 = vmatpush1.msra.mxu0 0.0
    %741 = vmatprep.subr.mxu0 0.0
    %742 = vmatpush1.msra.mxu0 0.0
    %743 = vmatprep.subr.mxu0 0.0
    %744 = vmatpush1.msra.mxu0 0.0
    %745 = vmatprep.subr.mxu0 0.0
    %746 = vmatpush1.msra.mxu0 0.0
    %747 = vmatprep.subr.mxu0 0.0
    %748 = vmatpush1.msra.mxu0 0.0
    %749 = vmatprep.subr.mxu0 0.0
    %750 = vmatpush1.msra.mxu0 0.0
    %751 = vmatprep.subr.mxu0 0.0
    %752 = vmatpush1.msra.mxu0 0.0
    %753 = vmatprep.subr.mxu0 0.0
    %754 = vmatpush1.msra.mxu0 0.0
    %755 = vmatprep.subr.mxu0 0.0
    %756 = vmatpush1.msra.mxu0 0.0
    %757 = vmatprep.subr.mxu0 0.0
    %758 = vmatpush1.msra.mxu0 0.0
    %759 = vmatprep.subr.mxu0 0.0
    %760 = vmatpush1.msra.mxu0 0.0
    %761 = vmatprep.subr.mxu0 0.0
    %762 = vmatpush1.msra.mxu0 0.0
    %763 = vmatprep.subr.mxu0 0.0
    %764 = vmatpush1.msra.mxu0 0.0
    %765 = vmatprep.subr.mxu0 0.0
    %766 = vmatpush1.msra.mxu0 0.0
    %767 = vmatprep.subr.mxu0 0.0
    %768 = vmatpush1.msra.mxu0 0.0
    %769 = vmatprep.subr.mxu0 0.0
    %770 = vmatpush1.msra.mxu0 0.0
    %771 = vmatprep.subr.mxu0 0.0
    %772 = vmatpush1.msra.mxu0 0.0
    %773 = vmatprep.subr.mxu0 0.0
    %774 = vmatpush1.msra.mxu0 0.0
    %775 = vmatprep.subr.mxu0 0.0
    %776 = vmatpush1.msra.mxu0 0.0
    %777 = vmatprep.subr.mxu0 0.0
    %778 = vmatpush1.msra.mxu0 0.0
    %779 = vmatprep.subr.mxu0 0.0
    %780 = vmatpush1.msra.mxu0 0.0
    %781 = vmatprep.subr.mxu0 0.0
    %782 = vmatpush1.msra.mxu0 0.0
    %783 = vmatprep.mubr.f32.mxu0 0.0
    %784 = vmatmul.mubr.f32.gmra.mrb[0].mxu0 %v717
    %v785 = vpop.f32.mrb[0].mxu0
    %v786 = vadd.f32 0.0, %v785
    %v787 = vpop.f32.mrb[0].mxu0
    %788 = vdwg.mxu0
    %v789 = vmul.f32 %v541, %v786
    %790 = vst [vmem:[#allocation2] sm:$0xff] %v789
    // Predicated region
    $region34: #{tpu_custom_call.1} parent=1 // pred_check
      _
    $region35: #{tpu_custom_call.1} parent=1 // pred_check_branch
      %792 = sbr.rel (0) target = $region37
    $region36: #{tpu_custom_call.1} parent=1 // pred_region
      %s794 = ssub.s32 128, 128
      %795 = vsyncadd [#allocation3], %s794
      %s797 = sshll.u32 [#allocation2], 4
      %s798 = int_to_ptr.vmem [resolvable:$true] %s797
      %800 = dma.vmem_to_hbm [thread:$0]  %s798, 128, %s8, [#allocation3]
    $region37: #{tpu_custom_call.1} parent=1 // pred_fallthru
      _
    // Predicated region
    $region38: #{tpu_custom_call.1} parent=1 // pred_check
      _
    $region39: #{tpu_custom_call.1} parent=1 // pred_check_branch
      %802 = sbr.rel (0) target = $region41
    $region40: #{tpu_custom_call.1} parent=1 // pred_region
      %803 = dma.done [#allocation3], 128
    $region41: #{tpu_custom_call.1} parent=1 // pred_fallthru
      _
    %804 = vsyncpa [#allocation3], 1

</llo_original>
